<compile_context>
chip_gen: v7x
topology: tpu7x:2x2x1
jax: 0.10.0
libtpu: 0.0.40
codegen_flags: <defaults>
</compile_context>

<pallas_src>
import functools

import jax
import jax.numpy as jnp
from jax import lax
from jax.experimental import pallas as pl
from jax.experimental.pallas import tpu as pltpu

SCALE = 8
PAD = (384 - 256) // 2  # 64, fixed by the module definition


def _col_select(w, ow, dtype):
    """(W, OW) 0/1 selection matrix: output col j takes input col a iff
    PAD + a*SCALE <= j < PAD + a*SCALE + SCALE (zero in the pad columns)."""
    a = lax.broadcasted_iota(jnp.int32, (w, ow), 0) * SCALE + PAD
    j = lax.broadcasted_iota(jnp.int32, (w, ow), 1)
    return ((j >= a) & (j < a + SCALE)).astype(dtype)


def _upsample_pad_kernel(x_ref, o_ref, row_ref, *, cblk, h, w):
    # x_ref: (cblk, H, W)   o_ref: (cblk, OH, OW)   row_ref: (H, OW) VMEM scratch
    ih = SCALE * h                  # interior (non-pad) output rows
    ow = SCALE * w + 2 * PAD        # full output width
    cdtype = x_ref.dtype
    odtype = o_ref.dtype

    # Loop-invariant tensors, built ONCE per grid step (JAX does not CSE
    # iota/broadcast, so these must not live inside the channel loop).
    pcolt = _col_select(w, ow, cdtype)        # (W, OW) column replicate + pad
    zpad = jnp.zeros((PAD, ow), odtype)       # top/bottom pad stripe

    def channel_body(c, carry):
        # Lane-dim (column) nearest-replication + left/right zero pad, fused as
        # one 0/1-selection matmul on the MXU (exact: entries are 0/1).
        # TODO(synk): a non-finite x value (Inf/NaN) leaks into that row's pad
        # columns via 0*NaN; PyTorch keeps pads exactly 0 in that edge case.
        tmp = jnp.dot(x_ref[c], pcolt, preferred_element_type=jnp.float32)
        row_ref[...] = tmp.astype(odtype)     # park in VMEM, free MXU-result vregs

        # Top / bottom zero-pad stripes: full-OW lane-dense zero stores.
        o_ref[c, pl.ds(0, PAD), :] = zpad
        o_ref[c, pl.ds(PAD + ih, PAD), :] = zpad

        # Sublane-dim (row) nearest-replication: broadcast each padded input
        # row to SCALE output rows and store.  No second matmul — this is pure
        # vld/broadcast/vst work, hidden under the output write DMA.
        for a in range(h):                    # static: all offsets compile-time
            row = row_ref[pl.ds(a, 1), :]     # (1, OW)
            o_ref[c, pl.ds(PAD + a * SCALE, SCALE), :] = jnp.broadcast_to(
                row, (SCALE, ow))
        return carry

    # fori_loop (not a Python unroll) bounds live ranges across channels.
    lax.fori_loop(0, cblk, channel_body, 0)


def _vmem_budget_bytes():
    """Returns (usable block budget, vmem_limit_bytes) sized from the chip."""
    try:
        cap = int(pltpu.get_tpu_info().vmem_capacity_bytes)  # 64 MiB v7x, 128 MiB v5e/v6e
    except Exception:
        cap = 64 * 1024 * 1024                               # conservative fallback
    limit = min(int(cap * 0.75), 100 * 1024 * 1024)
    return int(limit * 0.8), limit                           # headroom for compiler scratch


def _choose_cblk(nc, in_bytes_per_c, out_bytes_per_c, budget):
    """Largest divisor of NC whose double-buffered blocks fit the VMEM budget,
    keeping >= 2 grid steps so both v7x TensorCores get work."""
    best = 1
    for cand in range(1, min(nc, 32) + 1):
        if nc % cand:
            continue
        if nc >= 2 and nc // cand < 2:
            continue  # never collapse the parallel grid to a single step
        if 2 * cand * (in_bytes_per_c + out_bytes_per_c) <= budget:
            best = cand
    return best


def upsample384_and_pad(x, ones_mask=None):
    # ones_mask is accepted but unused, exactly as in the PyTorch forward.
    N, C, H, W = x.shape
    OH = SCALE * H + 2 * PAD
    OW = SCALE * W + 2 * PAD
    NC = N * C
    itemsize = jnp.dtype(x.dtype).itemsize

    budget, vmem_limit = _vmem_budget_bytes()
    cblk = _choose_cblk(NC, H * W * itemsize, OH * OW * itemsize, budget)

    # Flatten N,C into one axis: better divisor choices + megacore-friendly grid.
    xf = x.reshape(NC, H, W)

    kernel = functools.partial(_upsample_pad_kernel, cblk=cblk, h=H, w=W)
    cost = pl.CostEstimate(
        flops=2 * NC * H * W * OW,                       # column-select matmul only
        transcendentals=0,
        bytes_accessed=NC * (H * W + OH * OW) * itemsize,
    )

    yf = pl.pallas_call(
        kernel,
        out_shape=jax.ShapeDtypeStruct((NC, OH, OW), x.dtype),
        grid_spec=pltpu.PrefetchScalarGridSpec(
            num_scalar_prefetch=0,
            grid=(NC // cblk,),
            in_specs=[pl.BlockSpec((cblk, H, W), lambda i: (i, 0, 0))],
            # NOTE: pipeline_mode=pl.Buffered(3) on the out_spec is a further
            # ~5% win on v7x only; left at default double-buffering for
            # portability across generations.
            out_specs=pl.BlockSpec((cblk, OH, OW), lambda i: (i, 0, 0)),
            scratch_shapes=[pltpu.VMEM((H, OW), x.dtype)],
        ),
        compiler_params=pltpu.CompilerParams(
            dimension_semantics=("parallel",),
            vmem_limit_bytes=vmem_limit),
        cost_estimate=cost,
    )(xf)
    return yf.reshape(N, C, OH, OW)


def _reference(x):
    up = jnp.repeat(jnp.repeat(x, SCALE, axis=2), SCALE, axis=3)
    return jnp.pad(up, ((0, 0), (0, 0), (PAD, PAD), (PAD, PAD)))


if __name__ == "__main__":
    key = jax.random.PRNGKey(0)
    k1, _ = jax.random.split(key)
    x = jax.random.normal(k1, (2, 4, 16, 16), dtype=jnp.float32)
    ones_mask = jnp.ones((2, 4, 16, 16), dtype=jnp.float32)  # unused by forward

    y = upsample384_and_pad(x, ones_mask)
    y = jax.block_until_ready(y)

    y_ref = _reference(x)
    assert y.shape == (2, 4, 256, 256), y.shape
    assert jnp.allclose(y, y_ref, atol=1e-6, rtol=1e-6), "mismatch vs reference"
    print("KERNEL_OK")
</pallas_src>

<mosaic_0001>
module attributes {stable_mosaic.version = 11 : i64} {
  func.func @_upsample_pad_kernel(%arg0: i32, %arg1: memref<4x16x16xf32, #tpu.memory_space<vmem>>, %arg2: memref<4x256x256xf32, #tpu.memory_space<vmem>>, %arg3: memref<16x256xf32, #tpu.memory_space<vmem>>) attributes {dimension_semantics = [#tpu.dimension_semantics<parallel>], iteration_bounds = array<i64: 2>, scalar_prefetch = 0 : i64, scratch_operands = 1 : i64, tpu.core_type = #tpu.core_type<tc>, window_params = [{transform_indices = @transform_0, window_bounds = array<i64: 4, 16, 16>}, {transform_indices = @transform_1, window_bounds = array<i64: 4, 256, 256>}]} {
    %0 = tpu.iota {dimensions = array<i32: 0>} : vector<16x256xi32>
    %c8_i32 = arith.constant 8 : i32
    %1 = vector.broadcast %c8_i32 : i32 to vector<16x256xi32>
    %2 = arith.muli %0, %1 : vector<16x256xi32>
    %c64_i32 = arith.constant 64 : i32
    %3 = vector.broadcast %c64_i32 : i32 to vector<16x256xi32>
    %4 = arith.addi %2, %3 : vector<16x256xi32>
    %5 = tpu.iota {dimensions = array<i32: 1>} : vector<16x256xi32>
    %6 = arith.cmpi sge, %5, %4 : vector<16x256xi32>
    %c8_i32_0 = arith.constant 8 : i32
    %7 = vector.broadcast %c8_i32_0 : i32 to vector<16x256xi32>
    %8 = arith.addi %4, %7 : vector<16x256xi32>
    %9 = arith.cmpi slt, %5, %8 : vector<16x256xi32>
    %10 = arith.andi %6, %9 : vector<16x256xi1>
    %11 = arith.extui %10 : vector<16x256xi1> to vector<16x256xi32>
    %12 = arith.sitofp %11 : vector<16x256xi32> to vector<16x256xf32>
    %cst = arith.constant 0.000000e+00 : f32
    %13 = vector.broadcast %cst : f32 to vector<64x256xf32>
    %c0_i32 = arith.constant 0 : i32
    %c4_i32 = arith.constant 4 : i32
    %14 = arith.addi %c0_i32, %c4_i32 : i32
    %c1_i32 = arith.constant 1 : i32
    scf.for %arg4 = %c0_i32 to %14 step %c1_i32  : i32 {
      %15 = arith.index_cast %arg4 : i32 to index
      %c0 = arith.constant 0 : index
      %c0_2 = arith.constant 0 : index
      %16 = vector.load %arg1[%15, %c0, %c0_2] : memref<4x16x16xf32, #tpu.memory_space<vmem>>, vector<1x16x16xf32>
      %17 = vector.shape_cast %16 : vector<1x16x16xf32> to vector<16x16xf32>
      %cst_3 = arith.constant dense<0.000000e+00> : vector<16x256xf32>
      %18 = tpu.matmul %17, %12, %cst_3 {dimension_numbers = #tpu.dot_dimension_numbers<[1], [0], [0], [1], [0, 0, 1, 1], [], []>} : vector<16x16xf32>, vector<16x256xf32>, vector<16x256xf32> -> vector<16x256xf32>
      %c0_4 = arith.constant 0 : index
      %c0_5 = arith.constant 0 : index
      %19 = vector.load %arg3[%c0_4, %c0_5] : memref<16x256xf32, #tpu.memory_space<vmem>>, vector<16x256xf32>
      tpu.vector_store %arg3[%c0_4, %c0_5], %18 {strides = array<i32>} : memref<16x256xf32, #tpu.memory_space<vmem>>, vector<16x256xf32>,
      %20 = arith.index_cast %arg4 : i32 to index
      %c0_6 = arith.constant 0 : index
      %c0_7 = arith.constant 0 : index
      %21 = vector.load %arg2[%20, %c0_6, %c0_7] : memref<4x256x256xf32, #tpu.memory_space<vmem>>, vector<1x64x256xf32>
      %22 = vector.shape_cast %21 : vector<1x64x256xf32> to vector<64x256xf32>
      %23 = vector.shape_cast %13 : vector<64x256xf32> to vector<1x64x256xf32>
      tpu.vector_store %arg2[%20, %c0_6, %c0_7], %23 {strides = array<i32>} : memref<4x256x256xf32, #tpu.memory_space<vmem>>, vector<1x64x256xf32>,
      %24 = arith.index_cast %arg4 : i32 to index
      %c192 = arith.constant 192 : index
      %c0_8 = arith.constant 0 : index
      %25 = vector.load %arg2[%24, %c192, %c0_8] : memref<4x256x256xf32, #tpu.memory_space<vmem>>, vector<1x64x256xf32>
      %26 = vector.shape_cast %25 : vector<1x64x256xf32> to vector<64x256xf32>
      %27 = vector.shape_cast %13 : vector<64x256xf32> to vector<1x64x256xf32>
      tpu.vector_store %arg2[%24, %c192, %c0_8], %27 {strides = array<i32>} : memref<4x256x256xf32, #tpu.memory_space<vmem>>, vector<1x64x256xf32>,
      %c0_9 = arith.constant 0 : index
      %c0_10 = arith.constant 0 : index
      %28 = vector.load %arg3[%c0_9, %c0_10] : memref<16x256xf32, #tpu.memory_space<vmem>>, vector<1x256xf32>
      %29 = vector.shape_cast %28 : vector<1x256xf32> to vector<1x256xf32>
      %30 = vector.broadcast %29 : vector<1x256xf32> to vector<8x256xf32>
      %31 = arith.index_cast %arg4 : i32 to index
      %c64 = arith.constant 64 : index
      %c0_11 = arith.constant 0 : index
      %32 = vector.load %arg2[%31, %c64, %c0_11] : memref<4x256x256xf32, #tpu.memory_space<vmem>>, vector<1x8x256xf32>
      %33 = vector.shape_cast %32 : vector<1x8x256xf32> to vector<8x256xf32>
      %34 = vector.shape_cast %30 : vector<8x256xf32> to vector<1x8x256xf32>
      tpu.vector_store %arg2[%31, %c64, %c0_11], %34 {strides = array<i32>} : memref<4x256x256xf32, #tpu.memory_space<vmem>>, vector<1x8x256xf32>,
      %c1 = arith.constant 1 : index
      %c0_12 = arith.constant 0 : index
      %35 = vector.load %arg3[%c1, %c0_12] : memref<16x256xf32, #tpu.memory_space<vmem>>, vector<1x256xf32>
      %36 = vector.shape_cast %35 : vector<1x256xf32> to vector<1x256xf32>
      %37 = vector.broadcast %36 : vector<1x256xf32> to vector<8x256xf32>
      %38 = arith.index_cast %arg4 : i32 to index
      %c72 = arith.constant 72 : index
      %c0_13 = arith.constant 0 : index
      %39 = vector.load %arg2[%38, %c72, %c0_13] : memref<4x256x256xf32, #tpu.memory_space<vmem>>, vector<1x8x256xf32>
      %40 = vector.shape_cast %39 : vector<1x8x256xf32> to vector<8x256xf32>
      %41 = vector.shape_cast %37 : vector<8x256xf32> to vector<1x8x256xf32>
      tpu.vector_store %arg2[%38, %c72, %c0_13], %41 {strides = array<i32>} : memref<4x256x256xf32, #tpu.memory_space<vmem>>, vector<1x8x256xf32>,
      %c2 = arith.constant 2 : index
      %c0_14 = arith.constant 0 : index
      %42 = vector.load %arg3[%c2, %c0_14] : memref<16x256xf32, #tpu.memory_space<vmem>>, vector<1x256xf32>
      %43 = vector.shape_cast %42 : vector<1x256xf32> to vector<1x256xf32>
      %44 = vector.broadcast %43 : vector<1x256xf32> to vector<8x256xf32>
      %45 = arith.index_cast %arg4 : i32 to index
      %c80 = arith.constant 80 : index
      %c0_15 = arith.constant 0 : index
      %46 = vector.load %arg2[%45, %c80, %c0_15] : memref<4x256x256xf32, #tpu.memory_space<vmem>>, vector<1x8x256xf32>
      %47 = vector.shape_cast %46 : vector<1x8x256xf32> to vector<8x256xf32>
      %48 = vector.shape_cast %44 : vector<8x256xf32> to vector<1x8x256xf32>
      tpu.vector_store %arg2[%45, %c80, %c0_15], %48 {strides = array<i32>} : memref<4x256x256xf32, #tpu.memory_space<vmem>>, vector<1x8x256xf32>,
      %c3 = arith.constant 3 : index
      %c0_16 = arith.constant 0 : index
      %49 = vector.load %arg3[%c3, %c0_16] : memref<16x256xf32, #tpu.memory_space<vmem>>, vector<1x256xf32>
      %50 = vector.shape_cast %49 : vector<1x256xf32> to vector<1x256xf32>
      %51 = vector.broadcast %50 : vector<1x256xf32> to vector<8x256xf32>
      %52 = arith.index_cast %arg4 : i32 to index
      %c88 = arith.constant 88 : index
      %c0_17 = arith.constant 0 : index
      %53 = vector.load %arg2[%52, %c88, %c0_17] : memref<4x256x256xf32, #tpu.memory_space<vmem>>, vector<1x8x256xf32>
      %54 = vector.shape_cast %53 : vector<1x8x256xf32> to vector<8x256xf32>
      %55 = vector.shape_cast %51 : vector<8x256xf32> to vector<1x8x256xf32>
      tpu.vector_store %arg2[%52, %c88, %c0_17], %55 {strides = array<i32>} : memref<4x256x256xf32, #tpu.memory_space<vmem>>, vector<1x8x256xf32>,
      %c4 = arith.constant 4 : index
      %c0_18 = arith.constant 0 : index
      %56 = vector.load %arg3[%c4, %c0_18] : memref<16x256xf32, #tpu.memory_space<vmem>>, vector<1x256xf32>
      %57 = vector.shape_cast %56 : vector<1x256xf32> to vector<1x256xf32>
      %58 = vector.broadcast %57 : vector<1x256xf32> to vector<8x256xf32>
      %59 = arith.index_cast %arg4 : i32 to index
      %c96 = arith.constant 96 : index
      %c0_19 = arith.constant 0 : index
      %60 = vector.load %arg2[%59, %c96, %c0_19] : memref<4x256x256xf32, #tpu.memory_space<vmem>>, vector<1x8x256xf32>
      %61 = vector.shape_cast %60 : vector<1x8x256xf32> to vector<8x256xf32>
      %62 = vector.shape_cast %58 : vector<8x256xf32> to vector<1x8x256xf32>
      tpu.vector_store %arg2[%59, %c96, %c0_19], %62 {strides = array<i32>} : memref<4x256x256xf32, #tpu.memory_space<vmem>>, vector<1x8x256xf32>,
      %c5 = arith.constant 5 : index
      %c0_20 = arith.constant 0 : index
      %63 = vector.load %arg3[%c5, %c0_20] : memref<16x256xf32, #tpu.memory_space<vmem>>, vector<1x256xf32>
      %64 = vector.shape_cast %63 : vector<1x256xf32> to vector<1x256xf32>
      %65 = vector.broadcast %64 : vector<1x256xf32> to vector<8x256xf32>
      %66 = arith.index_cast %arg4 : i32 to index
      %c104 = arith.constant 104 : index
      %c0_21 = arith.constant 0 : index
      %67 = vector.load %arg2[%66, %c104, %c0_21] : memref<4x256x256xf32, #tpu.memory_space<vmem>>, vector<1x8x256xf32>
      %68 = vector.shape_cast %67 : vector<1x8x256xf32> to vector<8x256xf32>
      %69 = vector.shape_cast %65 : vector<8x256xf32> to vector<1x8x256xf32>
      tpu.vector_store %arg2[%66, %c104, %c0_21], %69 {strides = array<i32>} : memref<4x256x256xf32, #tpu.memory_space<vmem>>, vector<1x8x256xf32>,
      %c6 = arith.constant 6 : index
      %c0_22 = arith.constant 0 : index
      %70 = vector.load %arg3[%c6, %c0_22] : memref<16x256xf32, #tpu.memory_space<vmem>>, vector<1x256xf32>
      %71 = vector.shape_cast %70 : vector<1x256xf32> to vector<1x256xf32>
      %72 = vector.broadcast %71 : vector<1x256xf32> to vector<8x256xf32>
      %73 = arith.index_cast %arg4 : i32 to index
      %c112 = arith.constant 112 : index
      %c0_23 = arith.constant 0 : index
      %74 = vector.load %arg2[%73, %c112, %c0_23] : memref<4x256x256xf32, #tpu.memory_space<vmem>>, vector<1x8x256xf32>
      %75 = vector.shape_cast %74 : vector<1x8x256xf32> to vector<8x256xf32>
      %76 = vector.shape_cast %72 : vector<8x256xf32> to vector<1x8x256xf32>
      tpu.vector_store %arg2[%73, %c112, %c0_23], %76 {strides = array<i32>} : memref<4x256x256xf32, #tpu.memory_space<vmem>>, vector<1x8x256xf32>,
      %c7 = arith.constant 7 : index
      %c0_24 = arith.constant 0 : index
      %77 = vector.load %arg3[%c7, %c0_24] : memref<16x256xf32, #tpu.memory_space<vmem>>, vector<1x256xf32>
      %78 = vector.shape_cast %77 : vector<1x256xf32> to vector<1x256xf32>
      %79 = vector.broadcast %78 : vector<1x256xf32> to vector<8x256xf32>
      %80 = arith.index_cast %arg4 : i32 to index
      %c120 = arith.constant 120 : index
      %c0_25 = arith.constant 0 : index
      %81 = vector.load %arg2[%80, %c120, %c0_25] : memref<4x256x256xf32, #tpu.memory_space<vmem>>, vector<1x8x256xf32>
      %82 = vector.shape_cast %81 : vector<1x8x256xf32> to vector<8x256xf32>
      %83 = vector.shape_cast %79 : vector<8x256xf32> to vector<1x8x256xf32>
      tpu.vector_store %arg2[%80, %c120, %c0_25], %83 {strides = array<i32>} : memref<4x256x256xf32, #tpu.memory_space<vmem>>, vector<1x8x256xf32>,
      %c8 = arith.constant 8 : index
      %c0_26 = arith.constant 0 : index
      %84 = vector.load %arg3[%c8, %c0_26] : memref<16x256xf32, #tpu.memory_space<vmem>>, vector<1x256xf32>
      %85 = vector.shape_cast %84 : vector<1x256xf32> to vector<1x256xf32>
      %86 = vector.broadcast %85 : vector<1x256xf32> to vector<8x256xf32>
      %87 = arith.index_cast %arg4 : i32 to index
      %c128 = arith.constant 128 : index
      %c0_27 = arith.constant 0 : index
      %88 = vector.load %arg2[%87, %c128, %c0_27] : memref<4x256x256xf32, #tpu.memory_space<vmem>>, vector<1x8x256xf32>
      %89 = vector.shape_cast %88 : vector<1x8x256xf32> to vector<8x256xf32>
      %90 = vector.shape_cast %86 : vector<8x256xf32> to vector<1x8x256xf32>
      tpu.vector_store %arg2[%87, %c128, %c0_27], %90 {strides = array<i32>} : memref<4x256x256xf32, #tpu.memory_space<vmem>>, vector<1x8x256xf32>,
      %c9 = arith.constant 9 : index
      %c0_28 = arith.constant 0 : index
      %91 = vector.load %arg3[%c9, %c0_28] : memref<16x256xf32, #tpu.memory_space<vmem>>, vector<1x256xf32>
      %92 = vector.shape_cast %91 : vector<1x256xf32> to vector<1x256xf32>
      %93 = vector.broadcast %92 : vector<1x256xf32> to vector<8x256xf32>
      %94 = arith.index_cast %arg4 : i32 to index
      %c136 = arith.constant 136 : index
      %c0_29 = arith.constant 0 : index
      %95 = vector.load %arg2[%94, %c136, %c0_29] : memref<4x256x256xf32, #tpu.memory_space<vmem>>, vector<1x8x256xf32>
      %96 = vector.shape_cast %95 : vector<1x8x256xf32> to vector<8x256xf32>
      %97 = vector.shape_cast %93 : vector<8x256xf32> to vector<1x8x256xf32>
      tpu.vector_store %arg2[%94, %c136, %c0_29], %97 {strides = array<i32>} : memref<4x256x256xf32, #tpu.memory_space<vmem>>, vector<1x8x256xf32>,
      %c10 = arith.constant 10 : index
      %c0_30 = arith.constant 0 : index
      %98 = vector.load %arg3[%c10, %c0_30] : memref<16x256xf32, #tpu.memory_space<vmem>>, vector<1x256xf32>
      %99 = vector.shape_cast %98 : vector<1x256xf32> to vector<1x256xf32>
      %100 = vector.broadcast %99 : vector<1x256xf32> to vector<8x256xf32>
      %101 = arith.index_cast %arg4 : i32 to index
      %c144 = arith.constant 144 : index
      %c0_31 = arith.constant 0 : index
      %102 = vector.load %arg2[%101, %c144, %c0_31] : memref<4x256x256xf32, #tpu.memory_space<vmem>>, vector<1x8x256xf32>
      %103 = vector.shape_cast %102 : vector<1x8x256xf32> to vector<8x256xf32>
      %104 = vector.shape_cast %100 : vector<8x256xf32> to vector<1x8x256xf32>
      tpu.vector_store %arg2[%101, %c144, %c0_31], %104 {strides = array<i32>} : memref<4x256x256xf32, #tpu.memory_space<vmem>>, vector<1x8x256xf32>,
      %c11 = arith.constant 11 : index
      %c0_32 = arith.constant 0 : index
      %105 = vector.load %arg3[%c11, %c0_32] : memref<16x256xf32, #tpu.memory_space<vmem>>, vector<1x256xf32>
      %106 = vector.shape_cast %105 : vector<1x256xf32> to vector<1x256xf32>
      %107 = vector.broadcast %106 : vector<1x256xf32> to vector<8x256xf32>
      %108 = arith.index_cast %arg4 : i32 to index
      %c152 = arith.constant 152 : index
      %c0_33 = arith.constant 0 : index
      %109 = vector.load %arg2[%108, %c152, %c0_33] : memref<4x256x256xf32, #tpu.memory_space<vmem>>, vector<1x8x256xf32>
      %110 = vector.shape_cast %109 : vector<1x8x256xf32> to vector<8x256xf32>
      %111 = vector.shape_cast %107 : vector<8x256xf32> to vector<1x8x256xf32>
      tpu.vector_store %arg2[%108, %c152, %c0_33], %111 {strides = array<i32>} : memref<4x256x256xf32, #tpu.memory_space<vmem>>, vector<1x8x256xf32>,
      %c12 = arith.constant 12 : index
      %c0_34 = arith.constant 0 : index
      %112 = vector.load %arg3[%c12, %c0_34] : memref<16x256xf32, #tpu.memory_space<vmem>>, vector<1x256xf32>
      %113 = vector.shape_cast %112 : vector<1x256xf32> to vector<1x256xf32>
      %114 = vector.broadcast %113 : vector<1x256xf32> to vector<8x256xf32>
      %115 = arith.index_cast %arg4 : i32 to index
      %c160 = arith.constant 160 : index
      %c0_35 = arith.constant 0 : index
      %116 = vector.load %arg2[%115, %c160, %c0_35] : memref<4x256x256xf32, #tpu.memory_space<vmem>>, vector<1x8x256xf32>
      %117 = vector.shape_cast %116 : vector<1x8x256xf32> to vector<8x256xf32>
      %118 = vector.shape_cast %114 : vector<8x256xf32> to vector<1x8x256xf32>
      tpu.vector_store %arg2[%115, %c160, %c0_35], %118 {strides = array<i32>} : memref<4x256x256xf32, #tpu.memory_space<vmem>>, vector<1x8x256xf32>,
      %c13 = arith.constant 13 : index
      %c0_36 = arith.constant 0 : index
      %119 = vector.load %arg3[%c13, %c0_36] : memref<16x256xf32, #tpu.memory_space<vmem>>, vector<1x256xf32>
      %120 = vector.shape_cast %119 : vector<1x256xf32> to vector<1x256xf32>
      %121 = vector.broadcast %120 : vector<1x256xf32> to vector<8x256xf32>
      %122 = arith.index_cast %arg4 : i32 to index
      %c168 = arith.constant 168 : index
      %c0_37 = arith.constant 0 : index
      %123 = vector.load %arg2[%122, %c168, %c0_37] : memref<4x256x256xf32, #tpu.memory_space<vmem>>, vector<1x8x256xf32>
      %124 = vector.shape_cast %123 : vector<1x8x256xf32> to vector<8x256xf32>
      %125 = vector.shape_cast %121 : vector<8x256xf32> to vector<1x8x256xf32>
      tpu.vector_store %arg2[%122, %c168, %c0_37], %125 {strides = array<i32>} : memref<4x256x256xf32, #tpu.memory_space<vmem>>, vector<1x8x256xf32>,
      %c14 = arith.constant 14 : index
      %c0_38 = arith.constant 0 : index
      %126 = vector.load %arg3[%c14, %c0_38] : memref<16x256xf32, #tpu.memory_space<vmem>>, vector<1x256xf32>
      %127 = vector.shape_cast %126 : vector<1x256xf32> to vector<1x256xf32>
      %128 = vector.broadcast %127 : vector<1x256xf32> to vector<8x256xf32>
      %129 = arith.index_cast %arg4 : i32 to index
      %c176 = arith.constant 176 : index
      %c0_39 = arith.constant 0 : index
      %130 = vector.load %arg2[%129, %c176, %c0_39] : memref<4x256x256xf32, #tpu.memory_space<vmem>>, vector<1x8x256xf32>
      %131 = vector.shape_cast %130 : vector<1x8x256xf32> to vector<8x256xf32>
      %132 = vector.shape_cast %128 : vector<8x256xf32> to vector<1x8x256xf32>
      tpu.vector_store %arg2[%129, %c176, %c0_39], %132 {strides = array<i32>} : memref<4x256x256xf32, #tpu.memory_space<vmem>>, vector<1x8x256xf32>,
      %c15 = arith.constant 15 : index
      %c0_40 = arith.constant 0 : index
      %133 = vector.load %arg3[%c15, %c0_40] : memref<16x256xf32, #tpu.memory_space<vmem>>, vector<1x256xf32>
      %134 = vector.shape_cast %133 : vector<1x256xf32> to vector<1x256xf32>
      %135 = vector.broadcast %134 : vector<1x256xf32> to vector<8x256xf32>
      %136 = arith.index_cast %arg4 : i32 to index
      %c184 = arith.constant 184 : index
      %c0_41 = arith.constant 0 : index
      %137 = vector.load %arg2[%136, %c184, %c0_41] : memref<4x256x256xf32, #tpu.memory_space<vmem>>, vector<1x8x256xf32>
      %138 = vector.shape_cast %137 : vector<1x8x256xf32> to vector<8x256xf32>
      %139 = vector.shape_cast %135 : vector<8x256xf32> to vector<1x8x256xf32>
      tpu.vector_store %arg2[%136, %c184, %c0_41], %139 {strides = array<i32>} : memref<4x256x256xf32, #tpu.memory_space<vmem>>, vector<1x8x256xf32>,
    }
    %c4_i32_1 = arith.constant 4 : i32
    return
  }
  func.func @transform_0(%arg0: i32) -> (i32, i32, i32) {
    %c0_i32 = arith.constant 0 : i32
    %c0_i32_0 = arith.constant 0 : i32
    %c0_i32_1 = arith.constant 0 : i32
    return %arg0, %c0_i32, %c0_i32_0 : i32, i32, i32
  }
  func.func @transform_1(%arg0: i32) -> (i32, i32, i32) {
    %c0_i32 = arith.constant 0 : i32
    %c0_i32_0 = arith.constant 0 : i32
    %c0_i32_1 = arith.constant 0 : i32
    return %arg0, %c0_i32, %c0_i32_0 : i32, i32, i32
  }
}

</mosaic_0001>

<llo_original>
// kernel: tpu_custom_call.1
$region0: #{tpu_custom_call.1}
  #allocation0 [shape = 'u32[]', space=smem, size = 0x4, offset = 0x4, fixed_abs, tag = 'smem constant byte address 0x4 - core index']
  #allocation1 [shape = 'u32[144,128]{1,0:T(1,128)}', space=vmem, size = 0x12000, scoped, tag = 'internal scratch']
  #allocation2 [shape = 'f32[16,256]{1,0:T(8,128)}', space=vmem, size = 0x4000, scoped, tag = 'scratch operand']
  %s0 = inlined_call_operand.hbm [shape: f32[8,16,16], index: 0, kind: input, shape index: {}]
  %s1 = inlined_call_operand.hbm [shape: f32[8,256,256], index: 1, kind: output, shape index: {}]
  %s2 = sld [smem:[#allocation0]]
  $region48: #{tpu_custom_call.1} parent=0
    _
  %s4 = ssub.s32 1, %s2
  %s5 = scalar_select 0, %s4, %s2
  $region1: #{tpu_custom_call.1} parent=0
    #allocation3 [shape = 'u8[65536]{0}', space=vmem, size = 0x10000, scoped, tag = 'input window, operand 0']
    #allocation4 [shape = 's32[2]{0}', space=sflag, size = 0x8, scoped, tag = 'scoped memory for tpu_custom_call.1']
    #allocation5 [shape = 's32[2]{0}', space=sflag, size = 0x8, scoped, tag = 'scoped memory for tpu_custom_call.1']
    #allocation6 [shape = 'u8[2097152]{0}', space=vmem, size = 0x200000, scoped, tag = 'output window, operand 0']
    %6 = vsyncpa [#allocation4], 0
    %s7 = scalar_lea.sflag [#allocation4], 1
    %8 = vsyncpa %s7, 0
    %9 = vsyncpa [#allocation5], 0
    %s10 = scalar_lea.sflag [#allocation5], 1
    %11 = vsyncpa %s10, 0
    loop: start=0, step=1, limit=4
    $region2: #{tpu_custom_call.1} parent=1 // loop_pre_header
      _
    $region3: #{tpu_custom_call.1} parent=1 // loop_header
      %s13 = sphi 0, %s17
      %p14 = scmp.ge.s32.totalorder %s13, 4
      %s23 = sphi 0, %s25
      %s26 = sphi 0, %s23
      %s27 = sphi 0, %s26
      %s43 = sphi 0, %s27
      %s49 = sphi 0, %s51
      %s52 = sphi 0, %s49
      %s53 = sphi 0, %s52
      %s69 = sphi 0, %s53
    $region4: #{tpu_custom_call.1} parent=1 // loop_header_branch
      %16 = sbr.rel (%p14) target = $region8
    $region5: #{tpu_custom_call.1} parent=1 // loop_body
      %s18 = ssub.s32 %s13, 1
      %s19 = ssub.s32 %s13, 2
      %s20 = sadd.s32 %s13, 1
      %s21 = ssub.s32 %s13, %s20
      %p22 = scmp.eq.s32.totalorder %s21, 0
      %s24 = sadd.s32 %s23, 1
      %s25 = scalar_select %p22, %s23, %s24
      %p28 = pneg %p22
      %p29 = scmp.eq.s32.totalorder %s13, 1
      %p30 = por %p28, %p29
      %p31 = scmp.ne.s32.totalorder %s23, %s26
      %p32 = scmp.eq.s32.totalorder %s13, 0
      %p33 = por %p31, %p32
      %p34 = scmp.ne.s32.totalorder %s23, %s26
      %p35 = scmp.eq.s32.totalorder %s18, 1
      %p36 = por %p34, %p35
      %p37 = scmp.ne.s32.totalorder %s26, %s27
      %p38 = scmp.eq.s32.totalorder %s18, 0
      %p39 = por %p37, %p38
      %p40 = scmp.ne.s32.totalorder %s26, %s27
      %p41 = scmp.eq.s32.totalorder %s19, 1
      %p42 = por %p40, %p41
      %p44 = scmp.ne.s32.totalorder %s27, %s43
      %p45 = scmp.eq.s32.totalorder %s19, 0
      %p46 = por %p44, %p45
      %s47 = ssub.s32 %s13, %s20
      %p48 = scmp.eq.s32.totalorder %s47, 0
      %s50 = sadd.s32 %s49, 1
      %s51 = scalar_select %p48, %s49, %s50
      %p54 = pneg %p48
      %p55 = scmp.eq.s32.totalorder %s13, 1
      %p56 = por %p54, %p55
      %p57 = scmp.ne.s32.totalorder %s49, %s52
      %p58 = scmp.eq.s32.totalorder %s13, 0
      %p59 = por %p57, %p58
      %p60 = scmp.ne.s32.totalorder %s49, %s52
      %p61 = scmp.eq.s32.totalorder %s18, 1
      %p62 = por %p60, %p61
      %p63 = scmp.ne.s32.totalorder %s52, %s53
      %p64 = scmp.eq.s32.totalorder %s18, 0
      %p65 = por %p63, %p64
      %p66 = scmp.ne.s32.totalorder %s52, %s53
      %p67 = scmp.eq.s32.totalorder %s19, 1
      %p68 = por %p66, %p67
      %p70 = scmp.ne.s32.totalorder %s53, %s69
      %p71 = scmp.eq.s32.totalorder %s19, 0
      %p72 = por %p70, %p71
      %p73 = scmp.le.s32.totalorder 1, %s13
      %p74 = scmp.lt.s32.totalorder %s13, 3
      %p75 = pnand %p73, %p74
      %p76 = pneg %p75
      // Predicated region
      $region9: #{tpu_custom_call.1} parent=5 // pred_check
        _
      $region10: #{tpu_custom_call.1} parent=5 // pred_check_branch
        %78 = sbr.rel (%p75) target = $region12
      $region11: #{tpu_custom_call.1} parent=5 // pred_region
        %s79 = ssub.s32 %s13, 1
      $region12: #{tpu_custom_call.1} parent=5 // pred_fallthru
        _
      %p80 = scmp.lt.s32.totalorder %s13, 2
      // Predicated region
      $region13: #{tpu_custom_call.1} parent=5 // pred_check
        %p81 = pneg %p80
      $region14: #{tpu_custom_call.1} parent=5 // pred_check_branch
        %83 = sbr.rel (%p81) target = $region16
      $region15: #{tpu_custom_call.1} parent=5 // pred_region
        // Predicated region
        $region17: #{tpu_custom_call.1} parent=15 // pred_check
          %p84 = pneg %p33
        $region18: #{tpu_custom_call.1} parent=15 // pred_check_branch
          %86 = sbr.rel (%p84) target = $region20
        $region19: #{tpu_custom_call.1} parent=15 // pred_region
          %s87 = sand.u32 %s23, 1
          %s88 = scalar_lea.sflag [#allocation4], %s87
          %s89 = sand.u32 %s23, 1
          %s90 = smul.addr %s89, 64
          %s91 = scalar_lea.vmem [#allocation3], %s90
          %s92 = smul.u32 4, %s13
          %s94 = ssub.s32 1024, 1024
          %95 = vsyncadd %s88, %s94
          %s96 = smul.addr %s92, 2
          %s97 = smul.addr %s96, 128
          %s98 = scalar_lea.hbm %s0, %s97
          %s99 = sshll.u32 %s91, 4
          %s100 = int_to_ptr.vmem [resolvable:$true] %s99
          %105 = dma.hbm_to_vmem [thread:$0]  %s98, 1024, %s100, %s88, 128, 128, 8
        $region20: #{tpu_custom_call.1} parent=15 // pred_fallthru
          _
      $region16: #{tpu_custom_call.1} parent=5 // pred_fallthru
        _
      %p106 = scmp.le.s32.totalorder 1, %s13
      %p107 = scmp.lt.s32.totalorder %s13, 3
      %p108 = pnand %p106, %p107
      %p109 = pneg %p108
      // Predicated region
      $region21: #{tpu_custom_call.1} parent=5 // pred_check
        _
      $region22: #{tpu_custom_call.1} parent=5 // pred_check_branch
        %111 = sbr.rel (%p108) target = $region24
      $region23: #{tpu_custom_call.1} parent=5 // pred_region
        %s112 = ssub.s32 %s13, 1
        %s113 = sand.u32 %s26, 1
        %s114 = scalar_lea.sflag [#allocation4], %s113
        %s115 = sand.u32 %s26, 1
        %s116 = smul.addr %s115, 64
        %s117 = scalar_lea.vmem [#allocation3], %s116
        // Predicated region
        $region25: #{tpu_custom_call.1} parent=23 // pred_check
          %p118 = pneg %p39
        $region26: #{tpu_custom_call.1} parent=23 // pred_check_branch
          %120 = sbr.rel (%p118) target = $region28
        $region27: #{tpu_custom_call.1} parent=23 // pred_region
          %121 = dma.done %s114, 1024
        $region28: #{tpu_custom_call.1} parent=23 // pred_fallthru
          _
        %s122 = sand.u32 %s26, 1
        %s123 = scalar_lea.sflag [#allocation4], %s122
        %s124 = sand.u32 %s26, 1
        %s125 = smul.addr %s124, 64
        %s126 = scalar_lea.vmem [#allocation3], %s125
        %p127 = pneg %p39
        %p128 = pneg %p36
        %p129 = pneg %p65
        %p130 = pneg %p62
        %s131 = sand.u32 %s52, 1
        %s132 = scalar_lea.sflag [#allocation5], %s131
        %s133 = sand.u32 %s52, 1
        %s134 = smul.addr %s133, 2048
        %s135 = scalar_lea.vmem [#allocation6], %s134
        %s136 = smul.u32 4, %s18
        %s137 = smul.u32 4, %s18
        %v138 = vlaneseq
        %v139 = vshrl.u32 %v138, 7
        %v140 = vadd.s32 %v139, 8
        %v141 = vmul.u32 %v139, 8
        %v142 = vmul.u32 %v140, 8
        %v143 = vadd.s32 %v141, 64
        %v144 = vadd.s32 %v142, 64
        %v145 = vlaneseq
        %v146 = vand.u32 %v145, 127
        %v147 = vadd.s32 %v146, 128
        %vm148 = vcmp.ge.s32.totalorder %v146, %v143
        %vm149 = vcmp.ge.s32.totalorder %v147, %v143
        %vm150 = vcmp.ge.s32.totalorder %v146, %v144
        %vm151 = vcmp.ge.s32.totalorder %v147, %v144
        %v152 = vadd.s32 %v143, 8
        %v153 = vadd.s32 %v144, 8
        %vm154 = vcmp.lt.s32.totalorder %v146, %v152
        %vm155 = vcmp.lt.s32.totalorder %v147, %v152
        %vm156 = vcmp.lt.s32.totalorder %v146, %v153
        %vm157 = vcmp.lt.s32.totalorder %v147, %v153
        %vm158 = vmand %vm148, %vm154
        %vm159 = vmand %vm149, %vm155
        %vm160 = vmand %vm150, %vm156
        %vm161 = vmand %vm151, %vm157
        %v162 = vsel %vm158, 1, 0
        %v163 = vsel %vm159, 1, 0
        %v164 = vsel %vm160, 1, 0
        %v165 = vsel %vm161, 1, 0
        %v166 = vcvt.s32.f32 %v162
        %v167 = vcvt.s32.f32 %v163
        %v168 = vcvt.s32.f32 %v164
        %v169 = vcvt.s32.f32 %v165
        loop: start=0, step=1, limit=4
        $region29: #{tpu_custom_call.1} parent=23 // loop_pre_header
          _
        $region30: #{tpu_custom_call.1} parent=23 // loop_header
          %s171 = sphi 0, %s175
          %p172 = scmp.ge.s32.totalorder %s171, 4
        $region31: #{tpu_custom_call.1} parent=23 // loop_header_branch
          %174 = sbr.rel (%p172) target = $region35
        $region32: #{tpu_custom_call.1} parent=23 // loop_body
          %s176 = smul.u32 %s171, 16
          %s177 = scalar_lea.vmem %s117, %s176 [#allocation3]
          %v178 = vld [vmem:[%s177] sm:$0xff]
          %v179 = vld [vmem:[%s177 + $0x8] sm:$0xff]
          %vm180 = vcmask 130048
          %v182 = vsel %vm180, %v178, 0
          %v185 = vsel %vm180, %v179, 0
          %187 = vmatprep.subr.mxu0 %v167
          %188 = vmatpush1.msra.mxu0 %v166
          %189 = vmatprep.subr.mxu0 %v169
          %190 = vmatpush1.msra.mxu0 %v168
          %191 = vmatprep.subr.mxu0 0.0
          %192 = vmatpush1.msra.mxu0 0.0
          %193 = vmatprep.subr.mxu0 0.0
          %194 = vmatpush1.msra.mxu0 0.0
          %195 = vmatprep.subr.mxu0 0.0
          %196 = vmatpush1.msra.mxu0 0.0
          %197 = vmatprep.subr.mxu0 0.0
          %198 = vmatpush1.msra.mxu0 0.0
          %199 = vmatprep.subr.mxu0 0.0
          %200 = vmatpush1.msra.mxu0 0.0
          %201 = vmatprep.subr.mxu0 0.0
          %202 = vmatpush1.msra.mxu0 0.0
          %203 = vmatprep.subr.mxu0 0.0
          %204 = vmatpush1.msra.mxu0 0.0
          %205 = vmatprep.subr.mxu0 0.0
          %206 = vmatpush1.msra.mxu0 0.0
          %207 = vmatprep.subr.mxu0 0.0
          %208 = vmatpush1.msra.mxu0 0.0
          %209 = vmatprep.subr.mxu0 0.0
          %210 = vmatpush1.msra.mxu0 0.0
          %211 = vmatprep.subr.mxu0 0.0
          %212 = vmatpush1.msra.mxu0 0.0
          %213 = vmatprep.subr.mxu0 0.0
          %214 = vmatpush1.msra.mxu0 0.0
          %215 = vmatprep.subr.mxu0 0.0
          %216 = vmatpush1.msra.mxu0 0.0
          %217 = vmatprep.subr.mxu0 0.0
          %218 = vmatpush1.msra.mxu0 0.0
          %219 = vmatprep.subr.mxu0 0.0
          %220 = vmatpush1.msra.mxu0 0.0
          %221 = vmatprep.subr.mxu0 0.0
          %222 = vmatpush1.msra.mxu0 0.0
          %223 = vmatprep.subr.mxu0 0.0
          %224 = vmatpush1.msra.mxu0 0.0
          %225 = vmatprep.subr.mxu0 0.0
          %226 = vmatpush1.msra.mxu0 0.0
          %227 = vmatprep.subr.mxu0 0.0
          %228 = vmatpush1.msra.mxu0 0.0
          %229 = vmatprep.subr.mxu0 0.0
          %230 = vmatpush1.msra.mxu0 0.0
          %231 = vmatprep.subr.mxu0 0.0
          %232 = vmatpush1.msra.mxu0 0.0
          %233 = vmatprep.subr.mxu0 0.0
          %234 = vmatpush1.msra.mxu0 0.0
          %235 = vmatprep.subr.mxu0 0.0
          %236 = vmatpush1.msra.mxu0 0.0
          %237 = vmatprep.subr.mxu0 0.0
          %238 = vmatpush1.msra.mxu0 0.0
          %239 = vmatprep.subr.mxu0 0.0
          %240 = vmatpush1.msra.mxu0 0.0
          %241 = vmatprep.subr.mxu0 0.0
          %242 = vmatpush1.msra.mxu0 0.0
          %243 = vmatprep.subr.mxu0 0.0
          %244 = vmatpush1.msra.mxu0 0.0
          %245 = vmatprep.subr.mxu0 0.0
          %246 = vmatpush1.msra.mxu0 0.0
          %247 = vmatprep.subr.mxu0 0.0
          %248 = vmatpush1.msra.mxu0 0.0
          %249 = vmatprep.subr.mxu0 0.0
          %250 = vmatpush1.msra.mxu0 0.0
          %251 = vmatprep.mubr.f32.mxu0 0.0
          %252 = vmatmul.mubr.f32.gmra.mrb[0].mxu0 %v182
          %v253 = vpop.f32.mrb[0].mxu0
          %v254 = vadd.f32 0.0, %v253
          %v255 = vpop.f32.mrb[0].mxu0
          %v256 = vadd.f32 0.0, %v255
          %257 = vmatprep.mubr.f32.mxu0 0.0
          %258 = vmatmul.mubr.f32.gmra.mrb[0].mxu0 %v185
          %v259 = vpop.f32.mrb[0].mxu0
          %v260 = vadd.f32 0.0, %v259
          %v261 = vpop.f32.mrb[0].mxu0
          %v262 = vadd.f32 0.0, %v261
          %263 = vdwg.mxu0
          %264 = vst [vmem:[#allocation2] sm:$0xff] %v254
          %265 = vst [vmem:[#allocation2 + $0x8] sm:$0xff] %v256
          %266 = vst [vmem:[#allocation2 + $0x10] sm:$0xff] %v260
          %267 = vst [vmem:[#allocation2 + $0x18] sm:$0xff] %v262
          %s268 = smul.u32 %s171, 64
          %s269 = smul.addr %s268, 8
          %s270 = scalar_lea.vmem %s135, %s269 [#allocation6]
          %271 = vst [vmem:[%s270] sm:$0xff] 0.0
          %272 = vst [vmem:[%s270 + $0x8] sm:$0xff] 0.0
          %273 = vst [vmem:[%s270 + $0x10] sm:$0xff] 0.0
          %274 = vst [vmem:[%s270 + $0x18] sm:$0xff] 0.0
          %275 = vst [vmem:[%s270 + $0x20] sm:$0xff] 0.0
          %276 = vst [vmem:[%s270 + $0x28] sm:$0xff] 0.0
          %277 = vst [vmem:[%s270 + $0x30] sm:$0xff] 0.0
          %278 = vst [vmem:[%s270 + $0x38] sm:$0xff] 0.0
          %279 = vst [vmem:[%s270 + $0x40] sm:$0xff] 0.0
          %280 = vst [vmem:[%s270 + $0x48] sm:$0xff] 0.0
          %281 = vst [vmem:[%s270 + $0x50] sm:$0xff] 0.0
          %282 = vst [vmem:[%s270 + $0x58] sm:$0xff] 0.0
          %283 = vst [vmem:[%s270 + $0x60] sm:$0xff] 0.0
          %284 = vst [vmem:[%s270 + $0x68] sm:$0xff] 0.0
          %285 = vst [vmem:[%s270 + $0x70] sm:$0xff] 0.0
          %286 = vst [vmem:[%s270 + $0x78] sm:$0xff] 0.0
          %287 = vst [vmem:[%s270 + $0x180] sm:$0xff] 0.0
          %288 = vst [vmem:[%s270 + $0x188] sm:$0xff] 0.0
          %289 = vst [vmem:[%s270 + $0x190] sm:$0xff] 0.0
          %290 = vst [vmem:[%s270 + $0x198] sm:$0xff] 0.0
          %291 = vst [vmem:[%s270 + $0x1a0] sm:$0xff] 0.0
          %292 = vst [vmem:[%s270 + $0x1a8] sm:$0xff] 0.0
          %293 = vst [vmem:[%s270 + $0x1b0] sm:$0xff] 0.0
          %294 = vst [vmem:[%s270 + $0x1b8] sm:$0xff] 0.0
          %295 = vst [vmem:[%s270 + $0x1c0] sm:$0xff] 0.0
          %296 = vst [vmem:[%s270 + $0x1c8] sm:$0xff] 0.0
          %297 = vst [vmem:[%s270 + $0x1d0] sm:$0xff] 0.0
          %298 = vst [vmem:[%s270 + $0x1d8] sm:$0xff] 0.0
          %299 = vst [vmem:[%s270 + $0x1e0] sm:$0xff] 0.0
          %300 = vst [vmem:[%s270 + $0x1e8] sm:$0xff] 0.0
          %301 = vst [vmem:[%s270 + $0x1f0] sm:$0xff] 0.0
          %302 = vst [vmem:[%s270 + $0x1f8] sm:$0xff] 0.0
          %v303 = vld [vmem:[#allocation2] ss:$8 sm:$0x3]
          %v305 = vlaneseq
          %v306 = vshrl.u32 %v305, 7
          %v307 = vsub.s32 0, %v306
          %v308 = vrot.slane %v303, %v307
          %v309 = vlaneseq
          %v310 = vshrl.u32 %v309, 7
          %v311 = vsub.s32 1, %v310
          %v312 = vrot.slane %v303, %v311
          %315 = vst [vmem:[%s270 + $0x80] sm:$0xff] %v308
          %316 = vst [vmem:[%s270 + $0x88] sm:$0xff] %v312
          %s317 = scalar_lea.vmem [#allocation2], 1
          %v318 = vld [vmem:[%s317] ss:$8 sm:$0x3]
          %v320 = vlaneseq
          %v321 = vshrl.u32 %v320, 7
          %v322 = vsub.s32 0, %v321
          %v323 = vrot.slane %v318, %v322
          %v324 = vlaneseq
          %v325 = vshrl.u32 %v324, 7
          %v326 = vsub.s32 1, %v325
          %v327 = vrot.slane %v318, %v326
          %330 = vst [vmem:[%s270 + $0x90] sm:$0xff] %v323
          %331 = vst [vmem:[%s270 + $0x98] sm:$0xff] %v327
          %s332 = scalar_lea.vmem [#allocation2], 2
          %v333 = vld [vmem:[%s332] ss:$8 sm:$0x3]
          %v335 = vlaneseq
          %v336 = vshrl.u32 %v335, 7
          %v337 = vsub.s32 0, %v336
          %v338 = vrot.slane %v333, %v337
          %v339 = vlaneseq
          %v340 = vshrl.u32 %v339, 7
          %v341 = vsub.s32 1, %v340
          %v342 = vrot.slane %v333, %v341
          %345 = vst [vmem:[%s270 + $0xa0] sm:$0xff] %v338
          %346 = vst [vmem:[%s270 + $0xa8] sm:$0xff] %v342
          %s347 = scalar_lea.vmem [#allocation2], 3
          %v348 = vld [vmem:[%s347] ss:$8 sm:$0x3]
          %v350 = vlaneseq
          %v351 = vshrl.u32 %v350, 7
          %v352 = vsub.s32 0, %v351
          %v353 = vrot.slane %v348, %v352
          %v354 = vlaneseq
          %v355 = vshrl.u32 %v354, 7
          %v356 = vsub.s32 1, %v355
          %v357 = vrot.slane %v348, %v356
          %360 = vst [vmem:[%s270 + $0xb0] sm:$0xff] %v353
          %361 = vst [vmem:[%s270 + $0xb8] sm:$0xff] %v357
          %s362 = scalar_lea.vmem [#allocation2], 4
          %v363 = vld [vmem:[%s362] ss:$8 sm:$0x3]
          %v365 = vlaneseq
          %v366 = vshrl.u32 %v365, 7
          %v367 = vsub.s32 0, %v366
          %v368 = vrot.slane %v363, %v367
          %v369 = vlaneseq
          %v370 = vshrl.u32 %v369, 7
          %v371 = vsub.s32 1, %v370
          %v372 = vrot.slane %v363, %v371
          %375 = vst [vmem:[%s270 + $0xc0] sm:$0xff] %v368
          %376 = vst [vmem:[%s270 + $0xc8] sm:$0xff] %v372
          %s377 = scalar_lea.vmem [#allocation2], 5
          %v378 = vld [vmem:[%s377] ss:$8 sm:$0x3]
          %v380 = vlaneseq
          %v381 = vshrl.u32 %v380, 7
          %v382 = vsub.s32 0, %v381
          %v383 = vrot.slane %v378, %v382
          %v384 = vlaneseq
          %v385 = vshrl.u32 %v384, 7
          %v386 = vsub.s32 1, %v385
          %v387 = vrot.slane %v378, %v386
          %390 = vst [vmem:[%s270 + $0xd0] sm:$0xff] %v383
          %391 = vst [vmem:[%s270 + $0xd8] sm:$0xff] %v387
          %s392 = scalar_lea.vmem [#allocation2], 6
          %v393 = vld [vmem:[%s392] ss:$8 sm:$0x3]
          %v395 = vlaneseq
          %v396 = vshrl.u32 %v395, 7
          %v397 = vsub.s32 0, %v396
          %v398 = vrot.slane %v393, %v397
          %v399 = vlaneseq
          %v400 = vshrl.u32 %v399, 7
          %v401 = vsub.s32 1, %v400
          %v402 = vrot.slane %v393, %v401
          %405 = vst [vmem:[%s270 + $0xe0] sm:$0xff] %v398
          %406 = vst [vmem:[%s270 + $0xe8] sm:$0xff] %v402
          %s407 = scalar_lea.vmem [#allocation2], 7
          %v408 = vld [vmem:[%s407] ss:$8 sm:$0x3]
          %v410 = vlaneseq
          %v411 = vshrl.u32 %v410, 7
          %v412 = vsub.s32 0, %v411
          %v413 = vrot.slane %v408, %v412
          %v414 = vlaneseq
          %v415 = vshrl.u32 %v414, 7
          %v416 = vsub.s32 1, %v415
          %v417 = vrot.slane %v408, %v416
          %420 = vst [vmem:[%s270 + $0xf0] sm:$0xff] %v413
          %421 = vst [vmem:[%s270 + $0xf8] sm:$0xff] %v417
          %s422 = scalar_lea.vmem [#allocation2], 16
          %v423 = vld [vmem:[%s422] ss:$8 sm:$0x3]
          %v425 = vlaneseq
          %v426 = vshrl.u32 %v425, 7
          %v427 = vsub.s32 0, %v426
          %v428 = vrot.slane %v423, %v427
          %v429 = vlaneseq
          %v430 = vshrl.u32 %v429, 7
          %v431 = vsub.s32 1, %v430
          %v432 = vrot.slane %v423, %v431
          %435 = vst [vmem:[%s270 + $0x100] sm:$0xff] %v428
          %436 = vst [vmem:[%s270 + $0x108] sm:$0xff] %v432
          %s437 = scalar_lea.vmem [#allocation2], 17
          %v438 = vld [vmem:[%s437] ss:$8 sm:$0x3]
          %v440 = vlaneseq
          %v441 = vshrl.u32 %v440, 7
          %v442 = vsub.s32 0, %v441
          %v443 = vrot.slane %v438, %v442
          %v444 = vlaneseq
          %v445 = vshrl.u32 %v444, 7
          %v446 = vsub.s32 1, %v445
          %v447 = vrot.slane %v438, %v446
          %450 = vst [vmem:[%s270 + $0x110] sm:$0xff] %v443
          %451 = vst [vmem:[%s270 + $0x118] sm:$0xff] %v447
          %s452 = scalar_lea.vmem [#allocation2], 18
          %v453 = vld [vmem:[%s452] ss:$8 sm:$0x3]
          %v455 = vlaneseq
          %v456 = vshrl.u32 %v455, 7
          %v457 = vsub.s32 0, %v456
          %v458 = vrot.slane %v453, %v457
          %v459 = vlaneseq
          %v460 = vshrl.u32 %v459, 7
          %v461 = vsub.s32 1, %v460
          %v462 = vrot.slane %v453, %v461
          %465 = vst [vmem:[%s270 + $0x120] sm:$0xff] %v458
          %466 = vst [vmem:[%s270 + $0x128] sm:$0xff] %v462
          %s467 = scalar_lea.vmem [#allocation2], 19
          %v468 = vld [vmem:[%s467] ss:$8 sm:$0x3]
          %v470 = vlaneseq
          %v471 = vshrl.u32 %v470, 7
          %v472 = vsub.s32 0, %v471
          %v473 = vrot.slane %v468, %v472
          %v474 = vlaneseq
          %v475 = vshrl.u32 %v474, 7
          %v476 = vsub.s32 1, %v475
          %v477 = vrot.slane %v468, %v476
          %480 = vst [vmem:[%s270 + $0x130] sm:$0xff] %v473
          %481 = vst [vmem:[%s270 + $0x138] sm:$0xff] %v477
          %s482 = scalar_lea.vmem [#allocation2], 20
          %v483 = vld [vmem:[%s482] ss:$8 sm:$0x3]
          %v485 = vlaneseq
          %v486 = vshrl.u32 %v485, 7
          %v487 = vsub.s32 0, %v486
          %v488 = vrot.slane %v483, %v487
          %v489 = vlaneseq
          %v490 = vshrl.u32 %v489, 7
          %v491 = vsub.s32 1, %v490
          %v492 = vrot.slane %v483, %v491
          %495 = vst [vmem:[%s270 + $0x140] sm:$0xff] %v488
          %496 = vst [vmem:[%s270 + $0x148] sm:$0xff] %v492
          %s497 = scalar_lea.vmem [#allocation2], 21
          %v498 = vld [vmem:[%s497] ss:$8 sm:$0x3]
          %v500 = vlaneseq
          %v501 = vshrl.u32 %v500, 7
          %v502 = vsub.s32 0, %v501
          %v503 = vrot.slane %v498, %v502
          %v504 = vlaneseq
          %v505 = vshrl.u32 %v504, 7
          %v506 = vsub.s32 1, %v505
          %v507 = vrot.slane %v498, %v506
          %510 = vst [vmem:[%s270 + $0x150] sm:$0xff] %v503
          %511 = vst [vmem:[%s270 + $0x158] sm:$0xff] %v507
          %s512 = scalar_lea.vmem [#allocation2], 22
          %v513 = vld [vmem:[%s512] ss:$8 sm:$0x3]
          %v515 = vlaneseq
          %v516 = vshrl.u32 %v515, 7
          %v517 = vsub.s32 0, %v516
          %v518 = vrot.slane %v513, %v517
          %v519 = vlaneseq
          %v520 = vshrl.u32 %v519, 7
          %v521 = vsub.s32 1, %v520
          %v522 = vrot.slane %v513, %v521
          %525 = vst [vmem:[%s270 + $0x160] sm:$0xff] %v518
          %526 = vst [vmem:[%s270 + $0x168] sm:$0xff] %v522
          %s527 = scalar_lea.vmem [#allocation2], 23
          %v528 = vld [vmem:[%s527] ss:$8 sm:$0x3]
          %v530 = vlaneseq
          %v531 = vshrl.u32 %v530, 7
          %v532 = vsub.s32 0, %v531
          %v533 = vrot.slane %v528, %v532
          %v534 = vlaneseq
          %v535 = vshrl.u32 %v534, 7
          %v536 = vsub.s32 1, %v535
          %v537 = vrot.slane %v528, %v536
          %540 = vst [vmem:[%s270 + $0x170] sm:$0xff] %v533
          %541 = vst [vmem:[%s270 + $0x178] sm:$0xff] %v537
        $region33: #{tpu_custom_call.1} parent=23 // loop_footer
          %s175 = sadd.s32 1, %s171
        $region34: #{tpu_custom_call.1} parent=23 // loop_footer_branch
          %170 = sbr.rel target = $region30
        $region35: #{tpu_custom_call.1} parent=23 // loop_exit
          _
        %s542 = sand.u32 %s52, 1
        %s543 = scalar_lea.sflag [#allocation5], %s542
        %s544 = sand.u32 %s52, 1
        %s545 = smul.addr %s544, 2048
        %s546 = scalar_lea.vmem [#allocation6], %s545
        // Predicated region
        $region36: #{tpu_custom_call.1} parent=23 // pred_check
          %p547 = pneg %p62
        $region37: #{tpu_custom_call.1} parent=23 // pred_check_branch
          %549 = sbr.rel (%p547) target = $region39
        $region38: #{tpu_custom_call.1} parent=23 // pred_region
          %s550 = smul.u32 4, %s18
          %s552 = ssub.s32 32768, 32768
          %553 = vsyncadd %s543, %s552
          %s554 = smul.addr %s550, 64
          %s555 = smul.addr %s554, 128
          %s556 = scalar_lea.hbm %s1, %s555
          %s557 = sshll.u32 %s546, 4
          %s558 = int_to_ptr.vmem [resolvable:$true] %s557
          %563 = dma.vmem_to_hbm [thread:$0]  %s558, 32768, %s556, %s543, 256, 256, 16
        $region39: #{tpu_custom_call.1} parent=23 // pred_fallthru
          _
      $region24: #{tpu_custom_call.1} parent=5 // pred_fallthru
        _
      %p564 = scmp.le.s32.totalorder 2, %s13
      // Predicated region
      $region40: #{tpu_custom_call.1} parent=5 // pred_check
        %p565 = pneg %p564
      $region41: #{tpu_custom_call.1} parent=5 // pred_check_branch
        %567 = sbr.rel (%p565) target = $region43
      $region42: #{tpu_custom_call.1} parent=5 // pred_region
        %s568 = ssub.s32 %s13, 2
        // Predicated region
        $region44: #{tpu_custom_call.1} parent=42 // pred_check
          %p569 = pneg %p68
        $region45: #{tpu_custom_call.1} parent=42 // pred_check_branch
          %571 = sbr.rel (%p569) target = $region47
        $region46: #{tpu_custom_call.1} parent=42 // pred_region
          %s572 = sand.u32 %s53, 1
          %s573 = scalar_lea.sflag [#allocation5], %s572
          %s574 = sand.u32 %s53, 1
          %s575 = smul.addr %s574, 2048
          %s576 = scalar_lea.vmem [#allocation6], %s575
          %577 = dma.done %s573, 32768
        $region47: #{tpu_custom_call.1} parent=42 // pred_fallthru
          _
      $region43: #{tpu_custom_call.1} parent=5 // pred_fallthru
        _
    $region6: #{tpu_custom_call.1} parent=1 // loop_footer
      %s17 = sadd.s32 1, %s13
    $region7: #{tpu_custom_call.1} parent=1 // loop_footer_branch
      %12 = sbr.rel target = $region3
    $region8: #{tpu_custom_call.1} parent=1 // loop_exit
      _
    %578 = vsyncpa [#allocation4], 1
    %s579 = scalar_lea.sflag [#allocation4], 1
    %580 = vsyncpa %s579, 1
    %581 = vsyncpa [#allocation5], 1
    %s582 = scalar_lea.sflag [#allocation5], 1
    %583 = vsyncpa %s582, 1

</llo_original>
